<compile_context>
chip_gen: v6e
topology: v6e:2x2x1
jax: 0.10.0
libtpu: 0.0.40
codegen_flags: <defaults>
</compile_context>

<pallas_src>
import functools

import jax
import jax.numpy as jnp
from jax.experimental import pallas as pl
from jax.experimental.pallas import tpu as pltpu


def _round_up(x, m):
    return (x + m - 1) // m * m


def _cdiv(a, b):
    return -(-a // b)


# ----------------------------------------------------------------------------
# Device / tile selection helpers
# ----------------------------------------------------------------------------

def _device_info():
    """Returns (vmem_capacity_bytes, has_two_tensorcores)."""
    vmem = None
    try:
        vmem = int(pltpu.get_tpu_info().vmem_capacity_bytes)
    except Exception:
        vmem = None
    kind = ""
    try:
        kind = jax.devices()[0].device_kind.lower()
    except Exception:
        pass
    two_tc = "v7" in kind
    if vmem is None:
        vmem = (64 << 20) if two_tc else (128 << 20)
    # 64 MiB per TensorCore is the v7x signature even if device_kind is opaque.
    two_tc = two_tc or vmem <= (64 << 20)
    return vmem, two_tc


def _choose_th(D, H, th_hint=None):
    """Hidden-dim tile: 512 on 128-MiB chips, 256 on v7x (128 for huge D)."""
    _, two_tc = _device_info()
    h_pad = _round_up(H, 128)
    if th_hint is None:
        th = 256 if two_tc else 512
        if two_tc and D >= 8192:
            th = 128  # keep the (D, th) weight slices inside v7x's 64 MiB
    else:
        th = _round_up(th_hint, 128)
    th = max(min(th, h_pad), 128)
    while h_pad % th:  # make th divide h_pad exactly (no wasted hidden cols)
        th -= 128
    return th


def _choose_tm(M, sub, tm_target, min_grid_m):
    """Pick an M tile <= tm_target minimizing padding waste (multiple of sub)."""
    cap = _round_up(_cdiv(M, max(min_grid_m, 1)), sub)
    tm_max = max(min(tm_target, cap), sub)
    cands = {tm_max}
    for k in range(1, 9):
        c = _round_up(_cdiv(M, k), sub)
        if sub <= c <= tm_max:
            cands.add(c)

    def waste(t):
        return _round_up(M, t) - M

    return min(cands, key=lambda t: (waste(t), -t))


def _choose_tm_and_vmem(M, d_pad, th, x_dtype, w_dtype, tm_hint=None):
    vmem_cap, two_tc = _device_info()
    vmem_limit = int(0.85 * vmem_cap)   # ~109 MiB on v5e/v6e, ~54 MiB on v7x
    budget = vmem_limit - (6 << 20)     # headroom for Mosaic internal scratch

    itemsize = jnp.dtype(x_dtype).itemsize
    w_itemsize = jnp.dtype(w_dtype).itemsize
    sub = {4: 8, 2: 16, 1: 32}.get(itemsize, 8)
    acc_in_out = (jnp.dtype(x_dtype) == jnp.dtype(jnp.float32))

    if tm_hint is not None:
        tm = max(min(_round_up(tm_hint, sub), _round_up(M, sub)), sub)
    else:
        # Arithmetic intensity per H step ~ 2*tm/itemsize FLOP per weight byte;
        # push past the HBM ridge on each generation.
        tm_target = 512 if two_tc else 1024
        min_grid_m = 2 if (two_tc and M > sub) else 1  # feed both v7x TCs
        tm = _choose_tm(M, sub, tm_target, min_grid_m)

    def footprint(t):
        fp = 2 * t * d_pad * itemsize                  # x tile (double-buffered)
        fp += 2 * d_pad * 2 * th * w_itemsize          # fused [W_fc | W_fc_act]
        fp += 2 * th * d_pad * w_itemsize              # W_fc_out tile
        fp += 2 * (2 * th + d_pad) * 8 * w_itemsize    # bias tiles (sublane pad)
        fp += 2 * t * d_pad * itemsize                 # output tile
        if not acc_in_out:
            fp += t * d_pad * 4                        # f32 accumulator scratch
        fp += 4 * t * 3 * th                           # f32 intermediates
        return fp

    while footprint(tm) > budget and tm > sub:
        tm = max(_round_up(tm // 2, sub), sub)
    return tm, vmem_limit


# ----------------------------------------------------------------------------
# Weight preparation (pad only if unaligned, fuse W_fc / W_fc_act)
# ----------------------------------------------------------------------------

def _pad2d(a, r, c):
    if a.shape == (r, c):
        return a  # already aligned: no HBM round-trip copy
    return jnp.zeros((r, c), a.dtype).at[: a.shape[0], : a.shape[1]].set(a)


def prepare_ffn_swiglu_weights(w1, b1, w2, b2, w3, b3, *, th):
    """Pad (only if needed) and fuse W_fc / W_fc_act into one blocked slab.

    Weights are (in, out) = W^T of the PyTorch nn.Linear weights.
    Call once, outside the per-token hot path. Returns (w12, b12, w3p, b3p)
    where w12[:, h*2*th : h*2*th+th] is W_fc block h and the next th columns
    are W_fc_act block h (same layout for b12).
    """
    D, H = w1.shape
    d_pad = _round_up(D, 128)
    h_pad = _round_up(H, 128)
    assert h_pad % th == 0, "th must divide the padded hidden dim"

    w1p = _pad2d(w1, d_pad, h_pad)
    w2p = _pad2d(w2, d_pad, h_pad)
    w3p = _pad2d(w3, h_pad, d_pad)
    b1p = _pad2d(b1.reshape(1, H), 1, h_pad)
    b2p = _pad2d(b2.reshape(1, H), 1, h_pad)
    b3p = _pad2d(b3.reshape(1, D), 1, d_pad)

    n_h = h_pad // th
    w12 = jnp.concatenate(
        [w1p.reshape(d_pad, n_h, th), w2p.reshape(d_pad, n_h, th)], axis=2
    ).reshape(d_pad, 2 * h_pad)
    b12 = jnp.concatenate(
        [b1p.reshape(1, n_h, th), b2p.reshape(1, n_h, th)], axis=2
    ).reshape(1, 2 * h_pad)
    return w12, b12, w3p, b3p


# ----------------------------------------------------------------------------
# Kernel
# ----------------------------------------------------------------------------

def _ffn_swiglu_kernel(x_ref, w12_ref, b12_ref, w3_ref, b3_ref, o_ref,
                       *acc_scratch):
    """One (tm, th) step of the hidden-dim reduction.

    x_ref   : (tm, D)      token tile (same tile for every H step)
    w12_ref : (D, 2*th)    fused [W_fc^T | W_fc_act^T] slice
    b12_ref : (1, 2*th)    fused [b_fc | b_fc_act] slice
    w3_ref  : (th, D)      W_fc_out^T slice
    b3_ref  : (1, D)       b_fc_out
    o_ref   : (tm, D)      output tile (resident across the H axis)
    acc_scratch: optional f32 VMEM accumulator (only for sub-f32 outputs;
                 f32 outputs accumulate directly into o_ref).
    """
    acc_ref = acc_scratch[0] if acc_scratch else o_ref
    th = w3_ref.shape[0]
    h_id = pl.program_id(1)

    @pl.when(h_id == 0)
    def _init():
        acc_ref[...] = jnp.zeros(acc_ref.shape, acc_ref.dtype)

    x = x_ref[...]
    # Single wide up-projection matmul for both branches.
    h_both = jnp.dot(x, w12_ref[...],
                     preferred_element_type=jnp.float32) + b12_ref[...]
    h_lin = h_both[:, :th]
    h_act = h_both[:, th:]

    # SwiGLU gate: fc(x) * SiLU(fc_act(x)); sigmoid runs on the EUP.
    gated = h_lin * (h_act * jax.nn.sigmoid(h_act))

    acc_ref[...] += jnp.dot(gated.astype(x.dtype), w3_ref[...],
                            preferred_element_type=jnp.float32)

    @pl.when(h_id == pl.num_programs(1) - 1)
    def _finalize():
        if acc_scratch:
            o_ref[...] = (acc_ref[...] + b3_ref[...]).astype(o_ref.dtype)
        else:
            o_ref[...] += b3_ref[...].astype(o_ref.dtype)  # b_out added once


# ----------------------------------------------------------------------------
# Wrappers
# ----------------------------------------------------------------------------

@functools.partial(jax.jit, static_argnames=("tm", "th", "vmem_limit"))
def _ffn_swiglu_call(x, w12, b12, w3, b3, *, tm, th, vmem_limit):
    B, S, D = x.shape
    M = B * S
    d_pad = w12.shape[0]
    h_pad = w3.shape[0]
    m_pad = _round_up(M, tm)

    x2d = x.reshape(M, D)
    if (m_pad, d_pad) != (M, D):
        # Zero padding is exact: padded hidden units gate to 0, padded D
        # channels only multiply zero weights, padded rows are sliced off.
        x2d = jnp.zeros((m_pad, d_pad), x.dtype).at[:M, :D].set(x2d)

    grid = (m_pad // tm, h_pad // th)
    grid_m = grid[0]
    out_dtype = x.dtype
    acc_in_out = (jnp.dtype(out_dtype) == jnp.dtype(jnp.float32))
    scratch_shapes = [] if acc_in_out else [pltpu.VMEM((tm, d_pad), jnp.float32)]

    x_bytes = jnp.dtype(x.dtype).itemsize
    w_bytes = jnp.dtype(w12.dtype).itemsize
    cost = pl.CostEstimate(
        flops=6 * m_pad * d_pad * h_pad + 4 * m_pad * h_pad,
        transcendentals=m_pad * h_pad,
        bytes_accessed=int(
            x_bytes * m_pad * d_pad                                    # x read
            + w_bytes * grid_m * (3 * d_pad * h_pad + 2 * h_pad + d_pad)  # weights per M tile
            + x_bytes * m_pad * d_pad                                  # output writeback
        ),
    )

    out2d = pl.pallas_call(
        _ffn_swiglu_kernel,
        out_shape=jax.ShapeDtypeStruct((m_pad, d_pad), out_dtype),
        grid_spec=pltpu.PrefetchScalarGridSpec(
            num_scalar_prefetch=0,
            grid=grid,
            in_specs=[
                pl.BlockSpec((tm, d_pad), lambda i, h: (i, 0)),       # x tile
                pl.BlockSpec((d_pad, 2 * th), lambda i, h: (0, h)),   # [W_fc|W_fc_act]
                pl.BlockSpec((1, 2 * th), lambda i, h: (0, h)),       # [b_fc|b_fc_act]
                pl.BlockSpec((th, d_pad), lambda i, h: (h, 0)),       # W_fc_out^T
                pl.BlockSpec((1, d_pad), lambda i, h: (0, 0)),        # b_fc_out
            ],
            out_specs=pl.BlockSpec((tm, d_pad), lambda i, h: (i, 0)),
            scratch_shapes=scratch_shapes,
        ),
        compiler_params=pltpu.CompilerParams(
            dimension_semantics=("parallel", "arbitrary"),
            vmem_limit_bytes=int(vmem_limit)),
        cost_estimate=cost,
    )(x2d, w12, b12, w3, b3)

    return out2d[:M, :D].reshape(B, S, D)


def ffn_swiglu_prepared(x, w12, b12, w3p, b3p, *, th, tm=None):
    """Hot-path entry point: takes pre-padded/fused weights."""
    B, S, D = x.shape
    M = B * S
    d_pad = w12.shape[0]
    tm_eff, vmem_limit = _choose_tm_and_vmem(M, d_pad, th, x.dtype, w12.dtype,
                                             tm_hint=tm)
    return _ffn_swiglu_call(x, w12, b12, w3p, b3p,
                            tm=tm_eff, th=th, vmem_limit=vmem_limit)


def ffn_swiglu(x, w1, b1, w2, b2, w3, b3, *, tm=None, th=None):
    """One-shot convenience wrapper (prepares weights then runs the kernel).

    x: (B, S, D); weights stored as (in, out) = W^T of the nn.Linear weights.
    In a real model call prepare_ffn_swiglu_weights() once and reuse it with
    ffn_swiglu_prepared() so the padding/fusion copies are not per-call.
    """
    D, H = w1.shape
    th_eff = _choose_th(D, H, th)
    params = prepare_ffn_swiglu_weights(w1, b1, w2, b2, w3, b3, th=th_eff)
    return ffn_swiglu_prepared(x, *params, th=th_eff, tm=tm)


def _ref_ffn_swiglu(x, w1, b1, w2, b2, w3, b3):
    h = (x @ w1 + b1) * jax.nn.silu(x @ w2 + b2)
    return h @ w3 + b3


if __name__ == "__main__":
    key = jax.random.PRNGKey(0)

    def make_case(B, S, D, H, k):
        ks = jax.random.split(k, 7)
        x = jax.random.normal(ks[0], (B, S, D), dtype=jnp.float32)
        w1 = jax.random.normal(ks[1], (D, H), dtype=jnp.float32) * 0.05
        b1 = jax.random.normal(ks[2], (H,), dtype=jnp.float32) * 0.05
        w2 = jax.random.normal(ks[3], (D, H), dtype=jnp.float32) * 0.05
        b2 = jax.random.normal(ks[4], (H,), dtype=jnp.float32) * 0.05
        w3 = jax.random.normal(ks[5], (H, D), dtype=jnp.float32) * 0.05
        b3 = jax.random.normal(ks[6], (D,), dtype=jnp.float32) * 0.05
        return x, w1, b1, w2, b2, w3, b3

    k1, k2 = jax.random.split(key)

    # Case 1: lane-aligned shapes with explicit small tiles so both grid axes
    # and the multi-step hidden reduction are exercised
    # (M = 2*128 = 256 tokens, D = 128, H = 512, tm = th = 128 -> grid (2, 4)).
    args1 = make_case(2, 128, 128, 512, k1)
    out1 = jax.block_until_ready(ffn_swiglu(*args1, tm=128, th=128))
    ref1 = _ref_ffn_swiglu(*args1)
    assert out1.shape == ref1.shape
    assert jnp.allclose(out1, ref1, atol=1e-3, rtol=1e-3), "case 1 mismatch"

    # Case 2: small unaligned shapes (B=2, S=8, D=32, H=64) with automatic
    # per-generation tile / VMEM selection; exercises the zero-padding path.
    args2 = make_case(2, 8, 32, 64, k2)
    out2 = jax.block_until_ready(ffn_swiglu(*args2))
    ref2 = _ref_ffn_swiglu(*args2)
    assert out2.shape == ref2.shape
    assert jnp.allclose(out2, ref2, atol=1e-3, rtol=1e-3), "case 2 mismatch"

    print("KERNEL_OK")
</pallas_src>

<mosaic_0001>
module attributes {stable_mosaic.version = 11 : i64} {
  func.func @_ffn_swiglu_kernel(%arg0: i32, %arg1: i32, %arg2: memref<128x128xf32, #tpu.memory_space<vmem>>, %arg3: memref<128x256xf32, #tpu.memory_space<vmem>>, %arg4: memref<1x256xf32, #tpu.memory_space<vmem>>, %arg5: memref<128x128xf32, #tpu.memory_space<vmem>>, %arg6: memref<1x128xf32, #tpu.memory_space<vmem>>, %arg7: memref<128x128xf32, #tpu.memory_space<vmem>>) attributes {dimension_semantics = [#tpu.dimension_semantics<parallel>, #tpu.dimension_semantics<arbitrary>], iteration_bounds = array<i64: 2, 4>, scalar_prefetch = 0 : i64, scratch_operands = 0 : i64, tpu.core_type = #tpu.core_type<tc>, window_params = [{transform_indices = @transform_0, window_bounds = array<i64: 128, 128>}, {transform_indices = @transform_1, window_bounds = array<i64: 128, 256>}, {transform_indices = @transform_2, window_bounds = array<i64: 1, 256>}, {transform_indices = @transform_3, window_bounds = array<i64: 128, 128>}, {pipeline_mode = #tpu.pipeline_mode<synchronous>, transform_indices = @transform_4, window_bounds = array<i64: 1, 128>}, {transform_indices = @transform_5, window_bounds = array<i64: 128, 128>}]} {
    %c0_i32 = arith.constant 0 : i32
    %0 = arith.cmpi eq, %arg1, %c0_i32 : i32
    %1 = arith.extui %0 : i1 to i32
    %c0_i32_0 = arith.constant 0 : i32
    %2 = arith.cmpi ne, %1, %c0_i32_0 : i32
    scf.if %2 {
      %cst_15 = arith.constant 0.000000e+00 : f32
      %26 = vector.broadcast %cst_15 : f32 to vector<128x128xf32>
      %c0_16 = arith.constant 0 : index
      %c0_17 = arith.constant 0 : index
      %27 = vector.load %arg7[%c0_16, %c0_17] : memref<128x128xf32, #tpu.memory_space<vmem>>, vector<128x128xf32>
      tpu.vector_store %arg7[%c0_16, %c0_17], %26 {strides = array<i32>} : memref<128x128xf32, #tpu.memory_space<vmem>>, vector<128x128xf32>,
    } else {
    }
    %c0 = arith.constant 0 : index
    %c0_1 = arith.constant 0 : index
    %3 = vector.load %arg2[%c0, %c0_1] : memref<128x128xf32, #tpu.memory_space<vmem>>, vector<128x128xf32>
    %c0_2 = arith.constant 0 : index
    %c0_3 = arith.constant 0 : index
    %4 = vector.load %arg3[%c0_2, %c0_3] : memref<128x256xf32, #tpu.memory_space<vmem>>, vector<128x256xf32>
    %cst = arith.constant dense<0.000000e+00> : vector<128x256xf32>
    %5 = tpu.matmul %3, %4, %cst {dimension_numbers = #tpu.dot_dimension_numbers<[1], [0], [0], [1], [0, 0, 1, 1], [], []>} : vector<128x128xf32>, vector<128x256xf32>, vector<128x256xf32> -> vector<128x256xf32>
    %c0_4 = arith.constant 0 : index
    %c0_5 = arith.constant 0 : index
    %6 = vector.load %arg4[%c0_4, %c0_5] : memref<1x256xf32, #tpu.memory_space<vmem>>, vector<1x256xf32>
    %7 = vector.broadcast %6 : vector<1x256xf32> to vector<128x256xf32>
    %8 = arith.addf %5, %7 : vector<128x256xf32>
    %9 = vector.extract_strided_slice %8 {offsets = [0, 0], sizes = [128, 128], strides = [1, 1]} : vector<128x256xf32> to vector<128x128xf32>
    %10 = vector.extract_strided_slice %8 {offsets = [0, 128], sizes = [128, 128], strides = [1, 1]} : vector<128x256xf32> to vector<128x128xf32>
    %11 = arith.negf %10 : vector<128x128xf32>
    %12 = math.exp %11 : vector<128x128xf32>
    %cst_6 = arith.constant 1.000000e+00 : f32
    %13 = vector.broadcast %cst_6 : f32 to vector<128x128xf32>
    %14 = arith.addf %13, %12 : vector<128x128xf32>
    %15 = arith.divf %13, %14 : vector<128x128xf32>
    %16 = arith.mulf %10, %15 : vector<128x128xf32>
    %17 = arith.mulf %9, %16 : vector<128x128xf32>
    %c0_7 = arith.constant 0 : index
    %c0_8 = arith.constant 0 : index
    %18 = vector.load %arg7[%c0_7, %c0_8] : memref<128x128xf32, #tpu.memory_space<vmem>>, vector<128x128xf32>
    %c0_9 = arith.constant 0 : index
    %c0_10 = arith.constant 0 : index
    %19 = vector.load %arg5[%c0_9, %c0_10] : memref<128x128xf32, #tpu.memory_space<vmem>>, vector<128x128xf32>
    %cst_11 = arith.constant dense<0.000000e+00> : vector<128x128xf32>
    %20 = tpu.matmul %17, %19, %cst_11 {dimension_numbers = #tpu.dot_dimension_numbers<[1], [0], [0], [1], [0, 0, 1, 1], [], []>} : vector<128x128xf32>, vector<128x128xf32>, vector<128x128xf32> -> vector<128x128xf32>
    %21 = arith.addf %18, %20 : vector<128x128xf32>
    %c0_12 = arith.constant 0 : index
    %c0_13 = arith.constant 0 : index
    %22 = vector.load %arg7[%c0_12, %c0_13] : memref<128x128xf32, #tpu.memory_space<vmem>>, vector<128x128xf32>
    tpu.vector_store %arg7[%c0_12, %c0_13], %21 {strides = array<i32>} : memref<128x128xf32, #tpu.memory_space<vmem>>, vector<128x128xf32>,
    %c3_i32 = arith.constant 3 : i32
    %23 = arith.cmpi eq, %arg1, %c3_i32 : i32
    %24 = arith.extui %23 : i1 to i32
    %c0_i32_14 = arith.constant 0 : i32
    %25 = arith.cmpi ne, %24, %c0_i32_14 : i32
    scf.if %25 {
      %c0_15 = arith.constant 0 : index
      %c0_16 = arith.constant 0 : index
      %26 = vector.load %arg7[%c0_15, %c0_16] : memref<128x128xf32, #tpu.memory_space<vmem>>, vector<128x128xf32>
      %c0_17 = arith.constant 0 : index
      %c0_18 = arith.constant 0 : index
      %27 = vector.load %arg6[%c0_17, %c0_18] : memref<1x128xf32, #tpu.memory_space<vmem>>, vector<1x128xf32>
      %28 = vector.broadcast %27 : vector<1x128xf32> to vector<128x128xf32>
      %29 = arith.addf %26, %28 : vector<128x128xf32>
      %c0_19 = arith.constant 0 : index
      %c0_20 = arith.constant 0 : index
      %30 = vector.load %arg7[%c0_19, %c0_20] : memref<128x128xf32, #tpu.memory_space<vmem>>, vector<128x128xf32>
      tpu.vector_store %arg7[%c0_19, %c0_20], %29 {strides = array<i32>} : memref<128x128xf32, #tpu.memory_space<vmem>>, vector<128x128xf32>,
    } else {
    }
    return
  }
  func.func @transform_0(%arg0: i32, %arg1: i32) -> (i32, i32) {
    %c0_i32 = arith.constant 0 : i32
    %c0_i32_0 = arith.constant 0 : i32
    return %arg0, %c0_i32 : i32, i32
  }
  func.func @transform_1(%arg0: i32, %arg1: i32) -> (i32, i32) {
    %c0_i32 = arith.constant 0 : i32
    %c0_i32_0 = arith.constant 0 : i32
    return %c0_i32, %arg1 : i32, i32
  }
  func.func @transform_2(%arg0: i32, %arg1: i32) -> (i32, i32) {
    %c0_i32 = arith.constant 0 : i32
    %c0_i32_0 = arith.constant 0 : i32
    return %c0_i32, %arg1 : i32, i32
  }
  func.func @transform_3(%arg0: i32, %arg1: i32) -> (i32, i32) {
    %c0_i32 = arith.constant 0 : i32
    %c0_i32_0 = arith.constant 0 : i32
    return %arg1, %c0_i32 : i32, i32
  }
  func.func @transform_4(%arg0: i32, %arg1: i32) -> (i32, i32) {
    %c0_i32 = arith.constant 0 : i32
    %c0_i32_0 = arith.constant 0 : i32
    %c0_i32_1 = arith.constant 0 : i32
    return %c0_i32, %c0_i32_0 : i32, i32
  }
  func.func @transform_5(%arg0: i32, %arg1: i32) -> (i32, i32) {
    %c0_i32 = arith.constant 0 : i32
    %c0_i32_0 = arith.constant 0 : i32
    return %arg0, %c0_i32 : i32, i32
  }
}

</mosaic_0001>

<llo_original>
// kernel: _ffn_swiglu_call.1
$region0: #{_ffn_swiglu_call.1}
  #allocation0 [shape = 'u32[]', space=smem, size = 0x4, offset = 0x4, fixed_abs, tag = 'smem constant byte address 0x4 - core index']
  #allocation1 [shape = 'u32[144,128]{1,0:T(1,128)}', space=vmem, size = 0x12000, scoped, tag = 'internal scratch']
  %s0 = inlined_call_operand.hbm [shape: f32[256,128], index: 0, kind: input, shape index: {}]
  %s1 = inlined_call_operand.hbm [shape: f32[128,1024], index: 1, kind: input, shape index: {}]
  %s2 = inlined_call_operand.hbm [shape: f32[1,1024], index: 2, kind: input, shape index: {}]
  %s3 = inlined_call_operand.hbm [shape: f32[512,128], index: 3, kind: input, shape index: {}]
  %s4 = inlined_call_operand.vmem [shape: f32[1,128], index: 4, kind: input, shape index: {}]
  %s5 = inlined_call_operand.hbm [shape: f32[256,128], index: 5, kind: output, shape index: {}]
  %s6 = sld [smem:[#allocation0]]
  $region77: #{_ffn_swiglu_call.1} parent=0
    _
  %s8 = ssub.s32 1, %s6
  %s9 = scalar_select 0, %s8, %s6
  $region1: #{_ffn_swiglu_call.1} parent=0
    #allocation2 [shape = 'u8[131072]{0}', space=vmem, size = 0x20000, scoped, tag = 'input window, operand 0']
    #allocation3 [shape = 's32[2]{0}', space=sflag, size = 0x8, scoped, tag = 'scoped memory for _ffn_swiglu_call.1']
    #allocation4 [shape = 's32[2]{0}', space=sflag, size = 0x8, scoped, tag = 'scoped memory for _ffn_swiglu_call.1']
    #allocation5 [shape = 'u8[262144]{0}', space=vmem, size = 0x40000, scoped, tag = 'input window, operand 1']
    #allocation6 [shape = 's32[2]{0}', space=sflag, size = 0x8, scoped, tag = 'scoped memory for _ffn_swiglu_call.1']
    #allocation7 [shape = 'u8[2048]{0}', space=vmem, size = 0x800, scoped, tag = 'input window, operand 2']
    #allocation8 [shape = 'u8[131072]{0}', space=vmem, size = 0x20000, scoped, tag = 'input window, operand 3']
    #allocation9 [shape = 's32[2]{0}', space=sflag, size = 0x8, scoped, tag = 'scoped memory for _ffn_swiglu_call.1']
    #allocation10 [shape = 'u8[131072]{0}', space=vmem, size = 0x20000, scoped, tag = 'output window, operand 0']
    %10 = vsyncpa [#allocation3], 0
    %s11 = scalar_lea.sflag [#allocation3], 1
    %12 = vsyncpa %s11, 0
    %13 = vsyncpa [#allocation6], 0
    %s14 = scalar_lea.sflag [#allocation6], 1
    %15 = vsyncpa %s14, 0
    %16 = vsyncpa [#allocation9], 0
    %s17 = scalar_lea.sflag [#allocation9], 1
    %18 = vsyncpa %s17, 0
    %19 = vsyncpa [#allocation4], 0
    %s20 = scalar_lea.sflag [#allocation4], 1
    %21 = vsyncpa %s20, 0
    loop: start=0, step=1, limit=10
    $region2: #{_ffn_swiglu_call.1} parent=1 // loop_pre_header
      _
    $region3: #{_ffn_swiglu_call.1} parent=1 // loop_header
      %s23 = sphi 0, %s27
      %p24 = scmp.ge.s32.totalorder %s23, 10
      %s30 = sphi 0, %s42
      %s31 = sphi 0, %s38
      %s32 = sphi 0, %s30
      %s33 = sphi 0, %s31
      %s34 = sphi 0, %s32
      %s35 = sphi 0, %s33
      %s45 = sphi 0, %s47
      %s48 = sphi 0, %s45
      %s49 = sphi 0, %s48
      %s65 = sphi 0, %s49
      %s71 = sphi 0, %s73
      %s74 = sphi 0, %s71
      %s75 = sphi 0, %s74
      %s91 = sphi 0, %s75
      %s97 = sphi 0, %s99
      %s100 = sphi 0, %s97
      %s101 = sphi 0, %s100
      %s117 = sphi 0, %s101
      %s123 = sphi 0, %s125
      %s126 = sphi 0, %s123
      %s127 = sphi 0, %s126
      %s143 = sphi 0, %s127
      %s147 = sphi 0, %s147
      %s149 = sphi 0, %s147
      %s150 = sphi 0, %s149
      %s164 = sphi 0, %s150
      %s170 = sphi 0, %s172
      %s173 = sphi 0, %s170
      %s174 = sphi 0, %s173
      %s190 = sphi 0, %s174
    $region4: #{_ffn_swiglu_call.1} parent=1 // loop_header_branch
      %26 = sbr.rel (%p24) target = $region8
    $region5: #{_ffn_swiglu_call.1} parent=1 // loop_body
      %s28 = ssub.s32 %s23, 1
      %s29 = ssub.s32 %s23, 2
      %s36 = sadd.s32 1, %s31
      %p37 = scmp.ge.s32.totalorder %s36, 4
      %s38 = scalar_select %p37, 0, %s36
      %s39 = sadd.s32 1, %s30
      %s40 = scalar_select %p37, %s39, %s30
      %p41 = scmp.ge.s32.totalorder %s40, 2
      %s42 = scalar_select %p41, 0, %s40
      %s43 = ssub.s32 %s30, %s42
      %p44 = scmp.eq.s32.totalorder %s43, 0
      %s46 = sadd.s32 %s45, 1
      %s47 = scalar_select %p44, %s45, %s46
      %p50 = pneg %p44
      %p51 = scmp.eq.s32.totalorder %s23, 7
      %p52 = por %p50, %p51
      %p53 = scmp.ne.s32.totalorder %s45, %s48
      %p54 = scmp.eq.s32.totalorder %s23, 0
      %p55 = por %p53, %p54
      %p56 = scmp.ne.s32.totalorder %s45, %s48
      %p57 = scmp.eq.s32.totalorder %s28, 7
      %p58 = por %p56, %p57
      %p59 = scmp.ne.s32.totalorder %s48, %s49
      %p60 = scmp.eq.s32.totalorder %s28, 0
      %p61 = por %p59, %p60
      %p62 = scmp.ne.s32.totalorder %s48, %s49
      %p63 = scmp.eq.s32.totalorder %s29, 7
      %p64 = por %p62, %p63
      %p66 = scmp.ne.s32.totalorder %s49, %s65
      %p67 = scmp.eq.s32.totalorder %s29, 0
      %p68 = por %p66, %p67
      %s69 = ssub.s32 %s31, %s38
      %p70 = scmp.eq.s32.totalorder %s69, 0
      %s72 = sadd.s32 %s71, 1
      %s73 = scalar_select %p70, %s71, %s72
      %p76 = pneg %p70
      %p77 = scmp.eq.s32.totalorder %s23, 7
      %p78 = por %p76, %p77
      %p79 = scmp.ne.s32.totalorder %s71, %s74
      %p80 = scmp.eq.s32.totalorder %s23, 0
      %p81 = por %p79, %p80
      %p82 = scmp.ne.s32.totalorder %s71, %s74
      %p83 = scmp.eq.s32.totalorder %s28, 7
      %p84 = por %p82, %p83
      %p85 = scmp.ne.s32.totalorder %s74, %s75
      %p86 = scmp.eq.s32.totalorder %s28, 0
      %p87 = por %p85, %p86
      %p88 = scmp.ne.s32.totalorder %s74, %s75
      %p89 = scmp.eq.s32.totalorder %s29, 7
      %p90 = por %p88, %p89
      %p92 = scmp.ne.s32.totalorder %s75, %s91
      %p93 = scmp.eq.s32.totalorder %s29, 0
      %p94 = por %p92, %p93
      %s95 = ssub.s32 %s31, %s38
      %p96 = scmp.eq.s32.totalorder %s95, 0
      %s98 = sadd.s32 %s97, 1
      %s99 = scalar_select %p96, %s97, %s98
      %p102 = pneg %p96
      %p103 = scmp.eq.s32.totalorder %s23, 7
      %p104 = por %p102, %p103
      %p105 = scmp.ne.s32.totalorder %s97, %s100
      %p106 = scmp.eq.s32.totalorder %s23, 0
      %p107 = por %p105, %p106
      %p108 = scmp.ne.s32.totalorder %s97, %s100
      %p109 = scmp.eq.s32.totalorder %s28, 7
      %p110 = por %p108, %p109
      %p111 = scmp.ne.s32.totalorder %s100, %s101
      %p112 = scmp.eq.s32.totalorder %s28, 0
      %p113 = por %p111, %p112
      %p114 = scmp.ne.s32.totalorder %s100, %s101
      %p115 = scmp.eq.s32.totalorder %s29, 7
      %p116 = por %p114, %p115
      %p118 = scmp.ne.s32.totalorder %s101, %s117
      %p119 = scmp.eq.s32.totalorder %s29, 0
      %p120 = por %p118, %p119
      %s121 = ssub.s32 %s31, %s38
      %p122 = scmp.eq.s32.totalorder %s121, 0
      %s124 = sadd.s32 %s123, 1
      %s125 = scalar_select %p122, %s123, %s124
      %p128 = pneg %p122
      %p129 = scmp.eq.s32.totalorder %s23, 7
      %p130 = por %p128, %p129
      %p131 = scmp.ne.s32.totalorder %s123, %s126
      %p132 = scmp.eq.s32.totalorder %s23, 0
      %p133 = por %p131, %p132
      %p134 = scmp.ne.s32.totalorder %s123, %s126
      %p135 = scmp.eq.s32.totalorder %s28, 7
      %p136 = por %p134, %p135
      %p137 = scmp.ne.s32.totalorder %s126, %s127
      %p138 = scmp.eq.s32.totalorder %s28, 0
      %p139 = por %p137, %p138
      %p140 = scmp.ne.s32.totalorder %s126, %s127
      %p141 = scmp.eq.s32.totalorder %s29, 7
      %p142 = por %p140, %p141
      %p144 = scmp.ne.s32.totalorder %s127, %s143
      %p145 = scmp.eq.s32.totalorder %s29, 0
      %p146 = por %p144, %p145
      %s148 = sadd.s32 %s147, 1
      %p151 = scmp.eq.s32.totalorder %s23, 7
      %p152 = scmp.ne.s32.totalorder %s147, %s149
      %p153 = scmp.eq.s32.totalorder %s23, 0
      %p154 = por %p152, %p153
      %p155 = scmp.ne.s32.totalorder %s147, %s149
      %p156 = scmp.eq.s32.totalorder %s28, 7
      %p157 = por %p155, %p156
      %p158 = scmp.ne.s32.totalorder %s149, %s150
      %p159 = scmp.eq.s32.totalorder %s28, 0
      %p160 = por %p158, %p159
      %p161 = scmp.ne.s32.totalorder %s149, %s150
      %p162 = scmp.eq.s32.totalorder %s29, 7
      %p163 = por %p161, %p162
      %p165 = scmp.ne.s32.totalorder %s150, %s164
      %p166 = scmp.eq.s32.totalorder %s29, 0
      %p167 = por %p165, %p166
      %s168 = ssub.s32 %s30, %s42
      %p169 = scmp.eq.s32.totalorder %s168, 0
      %s171 = sadd.s32 %s170, 1
      %s172 = scalar_select %p169, %s170, %s171
      %p175 = pneg %p169
      %p176 = scmp.eq.s32.totalorder %s23, 7
      %p177 = por %p175, %p176
      %p178 = scmp.ne.s32.totalorder %s170, %s173
      %p179 = scmp.eq.s32.totalorder %s23, 0
      %p180 = por %p178, %p179
      %p181 = scmp.ne.s32.totalorder %s170, %s173
      %p182 = scmp.eq.s32.totalorder %s28, 7
      %p183 = por %p181, %p182
      %p184 = scmp.ne.s32.totalorder %s173, %s174
      %p185 = scmp.eq.s32.totalorder %s28, 0
      %p186 = por %p184, %p185
      %p187 = scmp.ne.s32.totalorder %s173, %s174
      %p188 = scmp.eq.s32.totalorder %s29, 7
      %p189 = por %p187, %p188
      %p191 = scmp.ne.s32.totalorder %s174, %s190
      %p192 = scmp.eq.s32.totalorder %s29, 0
      %p193 = por %p191, %p192
      %p194 = scmp.le.s32.totalorder 1, %s23
      %p195 = scmp.lt.s32.totalorder %s23, 9
      %p196 = pnand %p194, %p195
      %p197 = pneg %p196
      // Predicated region
      $region9: #{_ffn_swiglu_call.1} parent=5 // pred_check
        _
      $region10: #{_ffn_swiglu_call.1} parent=5 // pred_check_branch
        %199 = sbr.rel (%p196) target = $region12
      $region11: #{_ffn_swiglu_call.1} parent=5 // pred_region
        %s200 = ssub.s32 %s23, 1
        // Predicated region
        $region13: #{_ffn_swiglu_call.1} parent=11 // pred_check
          %p201 = pneg %p160
        $region14: #{_ffn_swiglu_call.1} parent=11 // pred_check_branch
          %203 = sbr.rel (%p201) target = $region16
        $region15: #{_ffn_swiglu_call.1} parent=11 // pred_region
          _
        $region16: #{_ffn_swiglu_call.1} parent=11 // pred_fallthru
          _
      $region12: #{_ffn_swiglu_call.1} parent=5 // pred_fallthru
        _
      %p204 = scmp.lt.s32.totalorder %s23, 8
      // Predicated region
      $region17: #{_ffn_swiglu_call.1} parent=5 // pred_check
        %p205 = pneg %p204
      $region18: #{_ffn_swiglu_call.1} parent=5 // pred_check_branch
        %207 = sbr.rel (%p205) target = $region20
      $region19: #{_ffn_swiglu_call.1} parent=5 // pred_region
        // Predicated region
        $region21: #{_ffn_swiglu_call.1} parent=19 // pred_check
          %p208 = pneg %p55
        $region22: #{_ffn_swiglu_call.1} parent=19 // pred_check_branch
          %210 = sbr.rel (%p208) target = $region24
        $region23: #{_ffn_swiglu_call.1} parent=19 // pred_region
          %s211 = sand.u32 %s45, 1
          %s212 = scalar_lea.sflag [#allocation3], %s211
          %s213 = sand.u32 %s45, 1
          %s214 = smul.addr %s213, 128
          %s215 = scalar_lea.vmem [#allocation2], %s214
          %s216 = smul.u32 16, %s30
          %s218 = ssub.s32 2048, 2048
          %219 = vsyncadd %s212, %s218
          %s220 = smul.addr %s216, 128
          %s221 = scalar_lea.hbm %s0, %s220
          %s222 = sshll.u32 %s215, 4
          %s223 = int_to_ptr.vmem [resolvable:$true] %s222
          %228 = dma.hbm_to_vmem [thread:$0]  %s221, 2048, %s223, %s212, 128, 128, 8
        $region24: #{_ffn_swiglu_call.1} parent=19 // pred_fallthru
          _
        // Predicated region
        $region25: #{_ffn_swiglu_call.1} parent=19 // pred_check
          %p229 = pneg %p81
        $region26: #{_ffn_swiglu_call.1} parent=19 // pred_check_branch
          %231 = sbr.rel (%p229) target = $region28
        $region27: #{_ffn_swiglu_call.1} parent=19 // pred_region
          %s232 = sand.u32 %s23, 1
          %s233 = scalar_lea.sflag [#allocation6], %s232
          %s234 = sand.u32 %s71, 1
          %s235 = smul.addr %s234, 256
          %s236 = scalar_lea.vmem [#allocation5], %s235
          %s237 = smul.u32 2, %s31
          %s239 = ssub.s32 4096, 4096
          %240 = vsyncadd %s233, %s239
          %s241 = smul.addr %s237, 128
          %s242 = scalar_lea.hbm %s1, %s241
          %s243 = sshll.u32 %s236, 4
          %s244 = int_to_ptr.vmem [resolvable:$true] %s243
          %249 = dma.hbm_to_vmem [thread:$0]  %s242, 4096, %s244, %s233, 1024, 256, 16
        $region28: #{_ffn_swiglu_call.1} parent=19 // pred_fallthru
          _
        // Predicated region
        $region29: #{_ffn_swiglu_call.1} parent=19 // pred_check
          %p250 = pneg %p107
        $region30: #{_ffn_swiglu_call.1} parent=19 // pred_check_branch
          %252 = sbr.rel (%p250) target = $region32
        $region31: #{_ffn_swiglu_call.1} parent=19 // pred_region
          %s253 = sand.u32 %s23, 1
          %s254 = scalar_lea.sflag [#allocation6], %s253
          %s255 = sand.u32 %s97, 1
          %s256 = smul.addr %s255, 2
          %s257 = scalar_lea.vmem [#allocation7], %s256
          %s258 = smul.u32 2, %s31
          %s260 = ssub.s32 32, 32
          %261 = vsyncadd %s254, %s260
          %s262 = smul.addr %s258, 16
          %s263 = scalar_lea.hbm %s2, %s262
          %s265 = sshll.u32 %s257, 4
          %s266 = int_to_ptr.vmem [resolvable:$true] %s265
          %268 = dma.hbm_to_vmem [thread:$0]  %s263, 32, %s266, %s254
        $region32: #{_ffn_swiglu_call.1} parent=19 // pred_fallthru
          _
        // Predicated region
        $region33: #{_ffn_swiglu_call.1} parent=19 // pred_check
          %p269 = pneg %p133
        $region34: #{_ffn_swiglu_call.1} parent=19 // pred_check_branch
          %271 = sbr.rel (%p269) target = $region36
        $region35: #{_ffn_swiglu_call.1} parent=19 // pred_region
          %s272 = sand.u32 %s123, 1
          %s273 = scalar_lea.sflag [#allocation9], %s272
          %s274 = sand.u32 %s123, 1
          %s275 = smul.addr %s274, 128
          %s276 = scalar_lea.vmem [#allocation8], %s275
          %s277 = smul.u32 16, %s31
          %s279 = ssub.s32 2048, 2048
          %280 = vsyncadd %s273, %s279
          %s281 = smul.addr %s277, 128
          %s282 = scalar_lea.hbm %s3, %s281
          %s283 = sshll.u32 %s276, 4
          %s284 = int_to_ptr.vmem [resolvable:$true] %s283
          %289 = dma.hbm_to_vmem [thread:$0]  %s282, 2048, %s284, %s273, 128, 128, 8
        $region36: #{_ffn_swiglu_call.1} parent=19 // pred_fallthru
          _
      $region20: #{_ffn_swiglu_call.1} parent=5 // pred_fallthru
        _
      %p290 = scmp.le.s32.totalorder 1, %s23
      %p291 = scmp.lt.s32.totalorder %s23, 9
      %p292 = pnand %p290, %p291
      %p293 = pneg %p292
      // Predicated region
      $region37: #{_ffn_swiglu_call.1} parent=5 // pred_check
        _
      $region38: #{_ffn_swiglu_call.1} parent=5 // pred_check_branch
        %295 = sbr.rel (%p292) target = $region40
      $region39: #{_ffn_swiglu_call.1} parent=5 // pred_region
        %s296 = ssub.s32 %s23, 1
        %s297 = sand.u32 %s48, 1
        %s298 = scalar_lea.sflag [#allocation3], %s297
        %s299 = sand.u32 %s48, 1
        %s300 = smul.addr %s299, 128
        %s301 = scalar_lea.vmem [#allocation2], %s300
        // Predicated region
        $region41: #{_ffn_swiglu_call.1} parent=39 // pred_check
          %p302 = pneg %p61
        $region42: #{_ffn_swiglu_call.1} parent=39 // pred_check_branch
          %304 = sbr.rel (%p302) target = $region44
        $region43: #{_ffn_swiglu_call.1} parent=39 // pred_region
          %305 = dma.done %s298, 2048
        $region44: #{_ffn_swiglu_call.1} parent=39 // pred_fallthru
          _
        %s306 = sand.u32 %s28, 1
        %s307 = scalar_lea.sflag [#allocation6], %s306
        %s308 = sand.u32 %s74, 1
        %s309 = smul.addr %s308, 256
        %s310 = scalar_lea.vmem [#allocation5], %s309
        // Predicated region
        $region45: #{_ffn_swiglu_call.1} parent=39 // pred_check
          %p311 = pneg %p87
        $region46: #{_ffn_swiglu_call.1} parent=39 // pred_check_branch
          %313 = sbr.rel (%p311) target = $region48
        $region47: #{_ffn_swiglu_call.1} parent=39 // pred_region
          %314 = dma.done %s307, 4096
        $region48: #{_ffn_swiglu_call.1} parent=39 // pred_fallthru
          _
        %s315 = sand.u32 %s28, 1
        %s316 = scalar_lea.sflag [#allocation6], %s315
        %s317 = sand.u32 %s100, 1
        %s318 = smul.addr %s317, 2
        %s319 = scalar_lea.vmem [#allocation7], %s318
        // Predicated region
        $region49: #{_ffn_swiglu_call.1} parent=39 // pred_check
          %p320 = pneg %p113
        $region50: #{_ffn_swiglu_call.1} parent=39 // pred_check_branch
          %322 = sbr.rel (%p320) target = $region52
        $region51: #{_ffn_swiglu_call.1} parent=39 // pred_region
          %323 = dma.done %s316, 32
        $region52: #{_ffn_swiglu_call.1} parent=39 // pred_fallthru
          _
        %s324 = sand.u32 %s126, 1
        %s325 = scalar_lea.sflag [#allocation9], %s324
        %s326 = sand.u32 %s126, 1
        %s327 = smul.addr %s326, 128
        %s328 = scalar_lea.vmem [#allocation8], %s327
        // Predicated region
        $region53: #{_ffn_swiglu_call.1} parent=39 // pred_check
          %p329 = pneg %p139
        $region54: #{_ffn_swiglu_call.1} parent=39 // pred_check_branch
          %331 = sbr.rel (%p329) target = $region56
        $region55: #{_ffn_swiglu_call.1} parent=39 // pred_region
          %332 = dma.done %s325, 2048
        $region56: #{_ffn_swiglu_call.1} parent=39 // pred_fallthru
          _
        %s333 = sand.u32 %s48, 1
        %s334 = scalar_lea.sflag [#allocation3], %s333
        %s335 = sand.u32 %s48, 1
        %s336 = smul.addr %s335, 128
        %s337 = scalar_lea.vmem [#allocation2], %s336
        %p338 = pneg %p61
        %p339 = pneg %p58
        %s340 = sand.u32 %s28, 1
        %s341 = scalar_lea.sflag [#allocation6], %s340
        %s342 = sand.u32 %s74, 1
        %s343 = smul.addr %s342, 256
        %s344 = scalar_lea.vmem [#allocation5], %s343
        %p345 = pneg %p87
        %p346 = pneg %p84
        %s347 = sand.u32 %s28, 1
        %s348 = scalar_lea.sflag [#allocation6], %s347
        %s349 = sand.u32 %s100, 1
        %s350 = smul.addr %s349, 2
        %s351 = scalar_lea.vmem [#allocation7], %s350
        %p352 = pneg %p113
        %p353 = pneg %p110
        %s354 = sand.u32 %s126, 1
        %s355 = scalar_lea.sflag [#allocation9], %s354
        %s356 = sand.u32 %s126, 1
        %s357 = smul.addr %s356, 128
        %s358 = scalar_lea.vmem [#allocation8], %s357
        %p359 = pneg %p139
        %p360 = pneg %p136
        %p361 = pneg %p160
        %p362 = pneg %p157
        %p363 = pneg %p186
        %p364 = pneg %p183
        %s365 = sand.u32 %s173, 1
        %s366 = scalar_lea.sflag [#allocation4], %s365
        %s367 = sand.u32 %s173, 1
        %s368 = smul.addr %s367, 128
        %s369 = scalar_lea.vmem [#allocation10], %s368
        %s370 = smul.u32 16, %s32
        %s371 = smul.u32 2, %s33
        %s372 = smul.u32 2, %s33
        %s373 = smul.u32 16, %s33
        %s374 = smul.u32 16, %s32
        %p375 = scmp.eq.s32.totalorder %s33, 0
        // Predicated region
        $region57: #{_ffn_swiglu_call.1} parent=39 // pred_check
          %p376 = pneg %p375
        $region58: #{_ffn_swiglu_call.1} parent=39 // pred_check_branch
          %378 = sbr.rel (%p376) target = $region60
        $region59: #{_ffn_swiglu_call.1} parent=39 // pred_region
          %379 = vst [vmem:[%s369] sm:$0xff] 0.0
          %380 = vst [vmem:[%s369 + $0x8] sm:$0xff] 0.0
          %381 = vst [vmem:[%s369 + $0x10] sm:$0xff] 0.0
          %382 = vst [vmem:[%s369 + $0x18] sm:$0xff] 0.0
          %383 = vst [vmem:[%s369 + $0x20] sm:$0xff] 0.0
          %384 = vst [vmem:[%s369 + $0x28] sm:$0xff] 0.0
          %385 = vst [vmem:[%s369 + $0x30] sm:$0xff] 0.0
          %386 = vst [vmem:[%s369 + $0x38] sm:$0xff] 0.0
          %387 = vst [vmem:[%s369 + $0x40] sm:$0xff] 0.0
          %388 = vst [vmem:[%s369 + $0x48] sm:$0xff] 0.0
          %389 = vst [vmem:[%s369 + $0x50] sm:$0xff] 0.0
          %390 = vst [vmem:[%s369 + $0x58] sm:$0xff] 0.0
          %391 = vst [vmem:[%s369 + $0x60] sm:$0xff] 0.0
          %392 = vst [vmem:[%s369 + $0x68] sm:$0xff] 0.0
          %393 = vst [vmem:[%s369 + $0x70] sm:$0xff] 0.0
          %394 = vst [vmem:[%s369 + $0x78] sm:$0xff] 0.0
        $region60: #{_ffn_swiglu_call.1} parent=39 // pred_fallthru
          _
        %v395 = vld [vmem:[%s301] sm:$0xff]
        %v396 = vld [vmem:[%s301 + $0x8] sm:$0xff]
        %v397 = vld [vmem:[%s301 + $0x10] sm:$0xff]
        %v398 = vld [vmem:[%s301 + $0x18] sm:$0xff]
        %v399 = vld [vmem:[%s301 + $0x20] sm:$0xff]
        %v400 = vld [vmem:[%s301 + $0x28] sm:$0xff]
        %v401 = vld [vmem:[%s301 + $0x30] sm:$0xff]
        %v402 = vld [vmem:[%s301 + $0x38] sm:$0xff]
        %v403 = vld [vmem:[%s301 + $0x40] sm:$0xff]
        %v404 = vld [vmem:[%s301 + $0x48] sm:$0xff]
        %v405 = vld [vmem:[%s301 + $0x50] sm:$0xff]
        %v406 = vld [vmem:[%s301 + $0x58] sm:$0xff]
        %v407 = vld [vmem:[%s301 + $0x60] sm:$0xff]
        %v408 = vld [vmem:[%s301 + $0x68] sm:$0xff]
        %v409 = vld [vmem:[%s301 + $0x70] sm:$0xff]
        %v410 = vld [vmem:[%s301 + $0x78] sm:$0xff]
        %v411 = vld [vmem:[%s310] sm:$0xff]
        %v412 = vld [vmem:[%s310 + $0x8] sm:$0xff]
        %v413 = vld [vmem:[%s310 + $0x10] sm:$0xff]
        %v414 = vld [vmem:[%s310 + $0x18] sm:$0xff]
        %v415 = vld [vmem:[%s310 + $0x20] sm:$0xff]
        %v416 = vld [vmem:[%s310 + $0x28] sm:$0xff]
        %v417 = vld [vmem:[%s310 + $0x30] sm:$0xff]
        %v418 = vld [vmem:[%s310 + $0x38] sm:$0xff]
        %v419 = vld [vmem:[%s310 + $0x40] sm:$0xff]
        %v420 = vld [vmem:[%s310 + $0x48] sm:$0xff]
        %v421 = vld [vmem:[%s310 + $0x50] sm:$0xff]
        %v422 = vld [vmem:[%s310 + $0x58] sm:$0xff]
        %v423 = vld [vmem:[%s310 + $0x60] sm:$0xff]
        %v424 = vld [vmem:[%s310 + $0x68] sm:$0xff]
        %v425 = vld [vmem:[%s310 + $0x70] sm:$0xff]
        %v426 = vld [vmem:[%s310 + $0x78] sm:$0xff]
        %v427 = vld [vmem:[%s310 + $0x80] sm:$0xff]
        %v428 = vld [vmem:[%s310 + $0x88] sm:$0xff]
        %v429 = vld [vmem:[%s310 + $0x90] sm:$0xff]
        %v430 = vld [vmem:[%s310 + $0x98] sm:$0xff]
        %v431 = vld [vmem:[%s310 + $0xa0] sm:$0xff]
        %v432 = vld [vmem:[%s310 + $0xa8] sm:$0xff]
        %v433 = vld [vmem:[%s310 + $0xb0] sm:$0xff]
        %v434 = vld [vmem:[%s310 + $0xb8] sm:$0xff]
        %v435 = vld [vmem:[%s310 + $0xc0] sm:$0xff]
        %v436 = vld [vmem:[%s310 + $0xc8] sm:$0xff]
        %v437 = vld [vmem:[%s310 + $0xd0] sm:$0xff]
        %v438 = vld [vmem:[%s310 + $0xd8] sm:$0xff]
        %v439 = vld [vmem:[%s310 + $0xe0] sm:$0xff]
        %v440 = vld [vmem:[%s310 + $0xe8] sm:$0xff]
        %v441 = vld [vmem:[%s310 + $0xf0] sm:$0xff]
        %v442 = vld [vmem:[%s310 + $0xf8] sm:$0xff]
        %v443 = vld [vmem:[%s319] sm:$0x3]
        %v445 = vlaneseq
        %v446 = vshrl.u32 %v445, 7
        %v447 = vsub.s32 0, %v446
        %v448 = vrot.slane %v443, %v447
        %v449 = vlaneseq
        %v450 = vshrl.u32 %v449, 7
        %v451 = vsub.s32 1, %v450
        %v452 = vrot.slane %v443, %v451
        %455 = vmatprep.subr.mxu0 %v442
        %456 = vmatpush1.msra.mxu0 %v441
        %457 = vmatprep.subr.mxu0 %v440
        %458 = vmatpush1.msra.mxu0 %v439
        %459 = vmatprep.subr.mxu0 %v438
        %460 = vmatpush1.msra.mxu0 %v437
        %461 = vmatprep.subr.mxu0 %v436
        %462 = vmatpush1.msra.mxu0 %v435
        %463 = vmatprep.subr.mxu0 %v434
        %464 = vmatpush1.msra.mxu0 %v433
        %465 = vmatprep.subr.mxu0 %v432
        %466 = vmatpush1.msra.mxu0 %v431
        %467 = vmatprep.subr.mxu0 %v430
        %468 = vmatpush1.msra.mxu0 %v429
        %469 = vmatprep.subr.mxu0 %v428
        %470 = vmatpush1.msra.mxu0 %v427
        %471 = vmatprep.subr.mxu0 %v426
        %472 = vmatpush1.msra.mxu0 %v425
        %473 = vmatprep.subr.mxu0 %v424
        %474 = vmatpush1.msra.mxu0 %v423
        %475 = vmatprep.subr.mxu0 %v422
        %476 = vmatpush1.msra.mxu0 %v421
        %477 = vmatprep.subr.mxu0 %v420
        %478 = vmatpush1.msra.mxu0 %v419
        %479 = vmatprep.subr.mxu0 %v418
        %480 = vmatpush1.msra.mxu0 %v417
        %481 = vmatprep.subr.mxu0 %v416
        %482 = vmatpush1.msra.mxu0 %v415
        %483 = vmatprep.subr.mxu0 %v414
        %484 = vmatpush1.msra.mxu0 %v413
        %485 = vmatprep.subr.mxu0 %v412
        %486 = vmatpush1.msra.mxu0 %v411
        %487 = vmatprep.subr.mxu0 0.0
        %488 = vmatpush2.msra.mxu0 0.0
        %489 = vmatprep.subr.mxu0 0.0
        %490 = vmatpush2.msra.mxu0 0.0
        %491 = vmatprep.subr.mxu0 0.0
        %492 = vmatpush2.msra.mxu0 0.0
        %493 = vmatprep.subr.mxu0 0.0
        %494 = vmatpush2.msra.mxu0 0.0
        %495 = vmatprep.subr.mxu0 0.0
        %496 = vmatpush2.msra.mxu0 0.0
        %497 = vmatprep.subr.mxu0 0.0
        %498 = vmatpush2.msra.mxu0 0.0
        %499 = vmatprep.subr.mxu0 0.0
        %500 = vmatpush2.msra.mxu0 0.0
        %501 = vmatprep.subr.mxu0 0.0
        %502 = vmatpush2.msra.mxu0 0.0
        %503 = vmatprep.subr.mxu0 0.0
        %504 = vmatpush2.msra.mxu0 0.0
        %505 = vmatprep.subr.mxu0 0.0
        %506 = vmatpush2.msra.mxu0 0.0
        %507 = vmatprep.subr.mxu0 0.0
        %508 = vmatpush2.msra.mxu0 0.0
        %509 = vmatprep.subr.mxu0 0.0
        %510 = vmatpush2.msra.mxu0 0.0
        %511 = vmatprep.subr.mxu0 0.0
        %512 = vmatpush2.msra.mxu0 0.0
        %513 = vmatprep.subr.mxu0 0.0
        %514 = vmatpush2.msra.mxu0 0.0
        %515 = vmatprep.subr.mxu0 0.0
        %516 = vmatpush2.msra.mxu0 0.0
        %517 = vmatprep.subr.mxu0 0.0
        %518 = vmatpush2.msra.mxu0 0.0
        %519 = vmatprep.mubr.f32.mxu0 0.0
        %520 = vmatmul.mubr.f32.gmra.mxu0 %v395
        %v521 = vpop.f32.mrf.mxu0
        %v522 = vadd.f32 %v448, %v521
        %v523 = vpop.f32.mrf.mxu0
        %v524 = vadd.f32 %v452, %v523
        %525 = vmatprep.mubr.f32.mxu0 0.0
        %526 = vmatmul.mubr.f32.gmra.mxu0 %v396
        %v527 = vpop.f32.mrf.mxu0
        %v528 = vadd.f32 %v448, %v527
        %v529 = vpop.f32.mrf.mxu0
        %v530 = vadd.f32 %v452, %v529
        %531 = vmatprep.mubr.f32.mxu0 0.0
        %532 = vmatmul.mubr.f32.gmra.mxu0 %v397
        %v533 = vpop.f32.mrf.mxu0
        %v534 = vadd.f32 %v448, %v533
        %v535 = vpop.f32.mrf.mxu0
        %v536 = vadd.f32 %v452, %v535
        %537 = vmatprep.mubr.f32.mxu0 0.0
        %538 = vmatmul.mubr.f32.gmra.mxu0 %v398
        %v539 = vpop.f32.mrf.mxu0
        %v540 = vadd.f32 %v448, %v539
        %v541 = vpop.f32.mrf.mxu0
        %v542 = vadd.f32 %v452, %v541
        %543 = vmatprep.mubr.f32.mxu0 0.0
        %544 = vmatmul.mubr.f32.gmra.mxu0 %v399
        %v545 = vpop.f32.mrf.mxu0
        %v546 = vadd.f32 %v448, %v545
        %v547 = vpop.f32.mrf.mxu0
        %v548 = vadd.f32 %v452, %v547
        %549 = vmatprep.mubr.f32.mxu0 0.0
        %550 = vmatmul.mubr.f32.gmra.mxu0 %v400
        %v551 = vpop.f32.mrf.mxu0
        %v552 = vadd.f32 %v448, %v551
        %v553 = vpop.f32.mrf.mxu0
        %v554 = vadd.f32 %v452, %v553
        %555 = vmatprep.mubr.f32.mxu0 0.0
        %556 = vmatmul.mubr.f32.gmra.mxu0 %v401
        %v557 = vpop.f32.mrf.mxu0
        %v558 = vadd.f32 %v448, %v557
        %v559 = vpop.f32.mrf.mxu0
        %v560 = vadd.f32 %v452, %v559
        %561 = vmatprep.mubr.f32.mxu0 0.0
        %562 = vmatmul.mubr.f32.gmra.mxu0 %v402
        %v563 = vpop.f32.mrf.mxu0
        %v564 = vadd.f32 %v448, %v563
        %v565 = vpop.f32.mrf.mxu0
        %v566 = vadd.f32 %v452, %v565
        %567 = vmatprep.mubr.f32.mxu0 0.0
        %568 = vmatmul.mubr.f32.gmra.mxu0 %v403
        %v569 = vpop.f32.mrf.mxu0
        %v570 = vadd.f32 %v448, %v569
        %v571 = vpop.f32.mrf.mxu0
        %v572 = vadd.f32 %v452, %v571
        %573 = vmatprep.mubr.f32.mxu0 0.0
        %574 = vmatmul.mubr.f32.gmra.mxu0 %v404
        %v575 = vpop.f32.mrf.mxu0
        %v576 = vadd.f32 %v448, %v575
        %v577 = vpop.f32.mrf.mxu0
        %v578 = vadd.f32 %v452, %v577
        %579 = vmatprep.mubr.f32.mxu0 0.0
        %580 = vmatmul.mubr.f32.gmra.mxu0 %v405
        %v581 = vpop.f32.mrf.mxu0
        %v582 = vadd.f32 %v448, %v581
        %v583 = vpop.f32.mrf.mxu0
        %v584 = vadd.f32 %v452, %v583
        %585 = vmatprep.mubr.f32.mxu0 0.0
        %586 = vmatmul.mubr.f32.gmra.mxu0 %v406
        %v587 = vpop.f32.mrf.mxu0
        %v588 = vadd.f32 %v448, %v587
        %v589 = vpop.f32.mrf.mxu0
        %v590 = vadd.f32 %v452, %v589
        %591 = vmatprep.mubr.f32.mxu0 0.0
        %592 = vmatmul.mubr.f32.gmra.mxu0 %v407
        %v593 = vpop.f32.mrf.mxu0
        %v594 = vadd.f32 %v448, %v593
        %v595 = vpop.f32.mrf.mxu0
        %v596 = vadd.f32 %v452, %v595
        %597 = vmatprep.mubr.f32.mxu0 0.0
        %598 = vmatmul.mubr.f32.gmra.mxu0 %v408
        %v599 = vpop.f32.mrf.mxu0
        %v600 = vadd.f32 %v448, %v599
        %v601 = vpop.f32.mrf.mxu0
        %v602 = vadd.f32 %v452, %v601
        %603 = vmatprep.mubr.f32.mxu0 0.0
        %604 = vmatmul.mubr.f32.gmra.mxu0 %v409
        %v605 = vpop.f32.mrf.mxu0
        %v606 = vadd.f32 %v448, %v605
        %v607 = vpop.f32.mrf.mxu0
        %v608 = vadd.f32 %v452, %v607
        %609 = vmatprep.mubr.f32.mxu0 0.0
        %610 = vmatmul.mubr.f32.gmra.mxu0 %v410
        %v611 = vpop.f32.mrf.mxu0
        %v612 = vadd.f32 %v448, %v611
        %v613 = vpop.f32.mrf.mxu0
        %v614 = vadd.f32 %v452, %v613
        %615 = vdwg.mxu0
        %v616 = vxor.u32 %v524, 2147483648
        %v617 = vxor.u32 %v530, 2147483648
        %v618 = vxor.u32 %v536, 2147483648
        %v619 = vxor.u32 %v542, 2147483648
        %v620 = vxor.u32 %v548, 2147483648
        %v621 = vxor.u32 %v554, 2147483648
        %v622 = vxor.u32 %v560, 2147483648
        %v623 = vxor.u32 %v566, 2147483648
        %v624 = vxor.u32 %v572, 2147483648
        %v625 = vxor.u32 %v578, 2147483648
        %v626 = vxor.u32 %v584, 2147483648
        %v627 = vxor.u32 %v590, 2147483648
        %v628 = vxor.u32 %v596, 2147483648
        %v629 = vxor.u32 %v602, 2147483648
        %v630 = vxor.u32 %v608, 2147483648
        %v631 = vxor.u32 %v614, 2147483648
        %v632 = vmul.f32 %v616, 1.442695
        %v633 = vpow.pop %v632
        %v634 = vmul.f32 %v617, 1.442695
        %v635 = vpow.pop %v634
        %v636 = vmul.f32 %v618, 1.442695
        %v637 = vpow.pop %v636
        %v638 = vmul.f32 %v619, 1.442695
        %v639 = vpow.pop %v638
        %v640 = vmul.f32 %v620, 1.442695
        %v641 = vpow.pop %v640
        %v642 = vmul.f32 %v621, 1.442695
        %v643 = vpow.pop %v642
        %v644 = vmul.f32 %v622, 1.442695
        %v645 = vpow.pop %v644
        %v646 = vmul.f32 %v623, 1.442695
        %v647 = vpow.pop %v646
        %v648 = vmul.f32 %v624, 1.442695
        %v649 = vpow.pop %v648
        %v650 = vmul.f32 %v625, 1.442695
        %v651 = vpow.pop %v650
        %v652 = vmul.f32 %v626, 1.442695
        %v653 = vpow.pop %v652
        %v654 = vmul.f32 %v627, 1.442695
        %v655 = vpow.pop %v654
        %v656 = vmul.f32 %v628, 1.442695
        %v657 = vpow.pop %v656
        %v658 = vmul.f32 %v629, 1.442695
        %v659 = vpow.pop %v658
        %v660 = vmul.f32 %v630, 1.442695
        %v661 = vpow.pop %v660
        %v662 = vmul.f32 %v631, 1.442695
        %v663 = vpow.pop %v662
        %v664 = vadd.f32 %v633, 1.0
        %v665 = vadd.f32 %v635, 1.0
        %v666 = vadd.f32 %v637, 1.0
        %v667 = vadd.f32 %v639, 1.0
        %v668 = vadd.f32 %v641, 1.0
        %v669 = vadd.f32 %v643, 1.0
        %v670 = vadd.f32 %v645, 1.0
        %v671 = vadd.f32 %v647, 1.0
        %v672 = vadd.f32 %v649, 1.0
        %v673 = vadd.f32 %v651, 1.0
        %v674 = vadd.f32 %v653, 1.0
        %v675 = vadd.f32 %v655, 1.0
        %v676 = vadd.f32 %v657, 1.0
        %v677 = vadd.f32 %v659, 1.0
        %v678 = vadd.f32 %v661, 1.0
        %v679 = vadd.f32 %v663, 1.0
        %v680 = vrcp.pop %v664
        %v681 = vmul.f32 1.0, %v680
        %v682 = vrcp.pop %v665
        %v683 = vmul.f32 1.0, %v682
        %v684 = vrcp.pop %v666
        %v685 = vmul.f32 1.0, %v684
        %v686 = vrcp.pop %v667
        %v687 = vmul.f32 1.0, %v686
        %v688 = vrcp.pop %v668
        %v689 = vmul.f32 1.0, %v688
        %v690 = vrcp.pop %v669
        %v691 = vmul.f32 1.0, %v690
        %v692 = vrcp.pop %v670
        %v693 = vmul.f32 1.0, %v692
        %v694 = vrcp.pop %v671
        %v695 = vmul.f32 1.0, %v694
        %v696 = vrcp.pop %v672
        %v697 = vmul.f32 1.0, %v696
        %v698 = vrcp.pop %v673
        %v699 = vmul.f32 1.0, %v698
        %v700 = vrcp.pop %v674
        %v701 = vmul.f32 1.0, %v700
        %v702 = vrcp.pop %v675
        %v703 = vmul.f32 1.0, %v702
        %v704 = vrcp.pop %v676
        %v705 = vmul.f32 1.0, %v704
        %v706 = vrcp.pop %v677
        %v707 = vmul.f32 1.0, %v706
        %v708 = vrcp.pop %v678
        %v709 = vmul.f32 1.0, %v708
        %v710 = vrcp.pop %v679
        %v711 = vmul.f32 1.0, %v710
        %v712 = vmul.f32 %v524, %v681
        %v713 = vmul.f32 %v530, %v683
        %v714 = vmul.f32 %v536, %v685
        %v715 = vmul.f32 %v542, %v687
        %v716 = vmul.f32 %v548, %v689
        %v717 = vmul.f32 %v554, %v691
        %v718 = vmul.f32 %v560, %v693
        %v719 = vmul.f32 %v566, %v695
        %v720 = vmul.f32 %v572, %v697
        %v721 = vmul.f32 %v578, %v699
        %v722 = vmul.f32 %v584, %v701
        %v723 = vmul.f32 %v590, %v703
        %v724 = vmul.f32 %v596, %v705
        %v725 = vmul.f32 %v602, %v707
        %v726 = vmul.f32 %v608, %v709
        %v727 = vmul.f32 %v614, %v711
        %v728 = vmul.f32 %v522, %v712
        %v729 = vmul.f32 %v528, %v713
        %v730 = vmul.f32 %v534, %v714
        %v731 = vmul.f32 %v540, %v715
        %v732 = vmul.f32 %v546, %v716
        %v733 = vmul.f32 %v552, %v717
        %v734 = vmul.f32 %v558, %v718
        %v735 = vmul.f32 %v564, %v719
        %v736 = vmul.f32 %v570, %v720
        %v737 = vmul.f32 %v576, %v721
        %v738 = vmul.f32 %v582, %v722
        %v739 = vmul.f32 %v588, %v723
        %v740 = vmul.f32 %v594, %v724
        %v741 = vmul.f32 %v600, %v725
        %v742 = vmul.f32 %v606, %v726
        %v743 = vmul.f32 %v612, %v727
        %v744 = vld [vmem:[%s369] sm:$0xff]
        %v745 = vld [vmem:[%s369 + $0x8] sm:$0xff]
        %v746 = vld [vmem:[%s369 + $0x10] sm:$0xff]
        %v747 = vld [vmem:[%s369 + $0x18] sm:$0xff]
        %v748 = vld [vmem:[%s369 + $0x20] sm:$0xff]
        %v749 = vld [vmem:[%s369 + $0x28] sm:$0xff]
        %v750 = vld [vmem:[%s369 + $0x30] sm:$0xff]
        %v751 = vld [vmem:[%s369 + $0x38] sm:$0xff]
        %v752 = vld [vmem:[%s369 + $0x40] sm:$0xff]
        %v753 = vld [vmem:[%s369 + $0x48] sm:$0xff]
        %v754 = vld [vmem:[%s369 + $0x50] sm:$0xff]
        %v755 = vld [vmem:[%s369 + $0x58] sm:$0xff]
        %v756 = vld [vmem:[%s369 + $0x60] sm:$0xff]
        %v757 = vld [vmem:[%s369 + $0x68] sm:$0xff]
        %v758 = vld [vmem:[%s369 + $0x70] sm:$0xff]
        %v759 = vld [vmem:[%s369 + $0x78] sm:$0xff]
        %v760 = vld [vmem:[%s328] sm:$0xff]
        %v761 = vld [vmem:[%s328 + $0x8] sm:$0xff]
        %v762 = vld [vmem:[%s328 + $0x10] sm:$0xff]
        %v763 = vld [vmem:[%s328 + $0x18] sm:$0xff]
        %v764 = vld [vmem:[%s328 + $0x20] sm:$0xff]
        %v765 = vld [vmem:[%s328 + $0x28] sm:$0xff]
        %v766 = vld [vmem:[%s328 + $0x30] sm:$0xff]
        %v767 = vld [vmem:[%s328 + $0x38] sm:$0xff]
        %v768 = vld [vmem:[%s328 + $0x40] sm:$0xff]
        %v769 = vld [vmem:[%s328 + $0x48] sm:$0xff]
        %v770 = vld [vmem:[%s328 + $0x50] sm:$0xff]
        %v771 = vld [vmem:[%s328 + $0x58] sm:$0xff]
        %v772 = vld [vmem:[%s328 + $0x60] sm:$0xff]
        %v773 = vld [vmem:[%s328 + $0x68] sm:$0xff]
        %v774 = vld [vmem:[%s328 + $0x70] sm:$0xff]
        %v775 = vld [vmem:[%s328 + $0x78] sm:$0xff]
        %776 = vmatprep.subr.mxu0 0.0
        %777 = vmatpush1.msra.mxu0 %v775
        %778 = vmatprep.subr.mxu0 0.0
        %779 = vmatpush1.msra.mxu0 %v774
        %780 = vmatprep.subr.mxu0 0.0
        %781 = vmatpush1.msra.mxu0 %v773
        %782 = vmatprep.subr.mxu0 0.0
        %783 = vmatpush1.msra.mxu0 %v772
        %784 = vmatprep.subr.mxu0 0.0
        %785 = vmatpush1.msra.mxu0 %v771
        %786 = vmatprep.subr.mxu0 0.0
        %787 = vmatpush1.msra.mxu0 %v770
        %788 = vmatprep.subr.mxu0 0.0
        %789 = vmatpush1.msra.mxu0 %v769
        %790 = vmatprep.subr.mxu0 0.0
        %791 = vmatpush1.msra.mxu0 %v768
        %792 = vmatprep.subr.mxu0 0.0
        %793 = vmatpush1.msra.mxu0 %v767
        %794 = vmatprep.subr.mxu0 0.0
        %795 = vmatpush1.msra.mxu0 %v766
        %796 = vmatprep.subr.mxu0 0.0
        %797 = vmatpush1.msra.mxu0 %v765
        %798 = vmatprep.subr.mxu0 0.0
        %799 = vmatpush1.msra.mxu0 %v764
        %800 = vmatprep.subr.mxu0 0.0
        %801 = vmatpush1.msra.mxu0 %v763
        %802 = vmatprep.subr.mxu0 0.0
        %803 = vmatpush1.msra.mxu0 %v762
        %804 = vmatprep.subr.mxu0 0.0
        %805 = vmatpush1.msra.mxu0 %v761
        %806 = vmatprep.subr.mxu0 0.0
        %807 = vmatpush1.msra.mxu0 %v760
        %808 = vmatprep.subr.mxu0 0.0
        %809 = vmatpush2.msra.mxu0 0.0
        %810 = vmatprep.subr.mxu0 0.0
        %811 = vmatpush2.msra.mxu0 0.0
        %812 = vmatprep.subr.mxu0 0.0
        %813 = vmatpush2.msra.mxu0 0.0
        %814 = vmatprep.subr.mxu0 0.0
        %815 = vmatpush2.msra.mxu0 0.0
        %816 = vmatprep.subr.mxu0 0.0
        %817 = vmatpush2.msra.mxu0 0.0
        %818 = vmatprep.subr.mxu0 0.0
        %819 = vmatpush2.msra.mxu0 0.0
        %820 = vmatprep.subr.mxu0 0.0
        %821 = vmatpush2.msra.mxu0 0.0
        %822 = vmatprep.subr.mxu0 0.0
        %823 = vmatpush2.msra.mxu0 0.0
        %824 = vmatprep.subr.mxu0 0.0
        %825 = vmatpush2.msra.mxu0 0.0
        %826 = vmatprep.subr.mxu0 0.0
        %827 = vmatpush2.msra.mxu0 0.0
        %828 = vmatprep.subr.mxu0 0.0
        %829 = vmatpush2.msra.mxu0 0.0
        %830 = vmatprep.subr.mxu0 0.0
        %831 = vmatpush2.msra.mxu0 0.0
        %832 = vmatprep.subr.mxu0 0.0
        %833 = vmatpush2.msra.mxu0 0.0
        %834 = vmatprep.subr.mxu0 0.0
        %835 = vmatpush2.msra.mxu0 0.0
        %836 = vmatprep.subr.mxu0 0.0
        %837 = vmatpush2.msra.mxu0 0.0
        %838 = vmatprep.subr.mxu0 0.0
        %839 = vmatpush2.msra.mxu0 0.0
        %840 = vmatprep.mubr.f32.mxu0 0.0
        %841 = vmatmul.mubr.f32.gmra.mxu0 %v728
        %v842 = vpop.f32.mrf.mxu0
        %v843 = vadd.f32 0.0, %v842
        %v844 = vpop.f32.mrf.mxu0
        %845 = vmatprep.mubr.f32.mxu0 0.0
        %846 = vmatmul.mubr.f32.gmra.mxu0 %v729
        %v847 = vpop.f32.mrf.mxu0
        %v848 = vadd.f32 0.0, %v847
        %v849 = vpop.f32.mrf.mxu0
        %850 = vmatprep.mubr.f32.mxu0 0.0
        %851 = vmatmul.mubr.f32.gmra.mxu0 %v730
        %v852 = vpop.f32.mrf.mxu0
        %v853 = vadd.f32 0.0, %v852
        %v854 = vpop.f32.mrf.mxu0
        %855 = vmatprep.mubr.f32.mxu0 0.0
        %856 = vmatmul.mubr.f32.gmra.mxu0 %v731
        %v857 = vpop.f32.mrf.mxu0
        %v858 = vadd.f32 0.0, %v857
        %v859 = vpop.f32.mrf.mxu0
        %860 = vmatprep.mubr.f32.mxu0 0.0
        %861 = vmatmul.mubr.f32.gmra.mxu0 %v732
        %v862 = vpop.f32.mrf.mxu0
        %v863 = vadd.f32 0.0, %v862
        %v864 = vpop.f32.mrf.mxu0
        %865 = vmatprep.mubr.f32.mxu0 0.0
        %866 = vmatmul.mubr.f32.gmra.mxu0 %v733
        %v867 = vpop.f32.mrf.mxu0
        %v868 = vadd.f32 0.0, %v867
        %v869 = vpop.f32.mrf.mxu0
        %870 = vmatprep.mubr.f32.mxu0 0.0
        %871 = vmatmul.mubr.f32.gmra.mxu0 %v734
        %v872 = vpop.f32.mrf.mxu0
        %v873 = vadd.f32 0.0, %v872
        %v874 = vpop.f32.mrf.mxu0
        %875 = vmatprep.mubr.f32.mxu0 0.0
        %876 = vmatmul.mubr.f32.gmra.mxu0 %v735
        %v877 = vpop.f32.mrf.mxu0
        %v878 = vadd.f32 0.0, %v877
        %v879 = vpop.f32.mrf.mxu0
        %880 = vmatprep.mubr.f32.mxu0 0.0
        %881 = vmatmul.mubr.f32.gmra.mxu0 %v736
        %v882 = vpop.f32.mrf.mxu0
        %v883 = vadd.f32 0.0, %v882
        %v884 = vpop.f32.mrf.mxu0
        %885 = vmatprep.mubr.f32.mxu0 0.0
        %886 = vmatmul.mubr.f32.gmra.mxu0 %v737
        %v887 = vpop.f32.mrf.mxu0
        %v888 = vadd.f32 0.0, %v887
        %v889 = vpop.f32.mrf.mxu0
        %890 = vmatprep.mubr.f32.mxu0 0.0
        %891 = vmatmul.mubr.f32.gmra.mxu0 %v738
        %v892 = vpop.f32.mrf.mxu0
        %v893 = vadd.f32 0.0, %v892
        %v894 = vpop.f32.mrf.mxu0
        %895 = vmatprep.mubr.f32.mxu0 0.0
        %896 = vmatmul.mubr.f32.gmra.mxu0 %v739
        %v897 = vpop.f32.mrf.mxu0
        %v898 = vadd.f32 0.0, %v897
        %v899 = vpop.f32.mrf.mxu0
        %900 = vmatprep.mubr.f32.mxu0 0.0
        %901 = vmatmul.mubr.f32.gmra.mxu0 %v740
        %v902 = vpop.f32.mrf.mxu0
        %v903 = vadd.f32 0.0, %v902
        %v904 = vpop.f32.mrf.mxu0
        %905 = vmatprep.mubr.f32.mxu0 0.0
        %906 = vmatmul.mubr.f32.gmra.mxu0 %v741
        %v907 = vpop.f32.mrf.mxu0
        %v908 = vadd.f32 0.0, %v907
        %v909 = vpop.f32.mrf.mxu0
        %910 = vmatprep.mubr.f32.mxu0 0.0
        %911 = vmatmul.mubr.f32.gmra.mxu0 %v742
        %v912 = vpop.f32.mrf.mxu0
        %v913 = vadd.f32 0.0, %v912
        %v914 = vpop.f32.mrf.mxu0
        %915 = vmatprep.mubr.f32.mxu0 0.0
        %916 = vmatmul.mubr.f32.gmra.mxu0 %v743
        %v917 = vpop.f32.mrf.mxu0
        %v918 = vadd.f32 0.0, %v917
        %v919 = vpop.f32.mrf.mxu0
        %920 = vdwg.mxu0
        %v921 = vadd.f32 %v744, %v843
        %v922 = vadd.f32 %v745, %v848
        %v923 = vadd.f32 %v746, %v853
        %v924 = vadd.f32 %v747, %v858
        %v925 = vadd.f32 %v748, %v863
        %v926 = vadd.f32 %v749, %v868
        %v927 = vadd.f32 %v750, %v873
        %v928 = vadd.f32 %v751, %v878
        %v929 = vadd.f32 %v752, %v883
        %v930 = vadd.f32 %v753, %v888
        %v931 = vadd.f32 %v754, %v893
        %v932 = vadd.f32 %v755, %v898
        %v933 = vadd.f32 %v756, %v903
        %v934 = vadd.f32 %v757, %v908
        %v935 = vadd.f32 %v758, %v913
        %v936 = vadd.f32 %v759, %v918
        %937 = vst [vmem:[%s369] sm:$0xff] %v921
        %938 = vst [vmem:[%s369 + $0x8] sm:$0xff] %v922
        %939 = vst [vmem:[%s369 + $0x10] sm:$0xff] %v923
        %940 = vst [vmem:[%s369 + $0x18] sm:$0xff] %v924
        %941 = vst [vmem:[%s369 + $0x20] sm:$0xff] %v925
        %942 = vst [vmem:[%s369 + $0x28] sm:$0xff] %v926
        %943 = vst [vmem:[%s369 + $0x30] sm:$0xff] %v927
        %944 = vst [vmem:[%s369 + $0x38] sm:$0xff] %v928
        %945 = vst [vmem:[%s369 + $0x40] sm:$0xff] %v929
        %946 = vst [vmem:[%s369 + $0x48] sm:$0xff] %v930
        %947 = vst [vmem:[%s369 + $0x50] sm:$0xff] %v931
        %948 = vst [vmem:[%s369 + $0x58] sm:$0xff] %v932
        %949 = vst [vmem:[%s369 + $0x60] sm:$0xff] %v933
        %950 = vst [vmem:[%s369 + $0x68] sm:$0xff] %v934
        %951 = vst [vmem:[%s369 + $0x70] sm:$0xff] %v935
        %952 = vst [vmem:[%s369 + $0x78] sm:$0xff] %v936
        %p953 = scmp.eq.s32.totalorder %s33, 3
        // Predicated region
        $region61: #{_ffn_swiglu_call.1} parent=39 // pred_check
          %p954 = pneg %p953
        $region62: #{_ffn_swiglu_call.1} parent=39 // pred_check_branch
          %956 = sbr.rel (%p954) target = $region64
        $region63: #{_ffn_swiglu_call.1} parent=39 // pred_region
          %v957 = vld [vmem:[%s369] sm:$0xff]
          %v958 = vld [vmem:[%s369 + $0x8] sm:$0xff]
          %v959 = vld [vmem:[%s369 + $0x10] sm:$0xff]
          %v960 = vld [vmem:[%s369 + $0x18] sm:$0xff]
          %v961 = vld [vmem:[%s369 + $0x20] sm:$0xff]
          %v962 = vld [vmem:[%s369 + $0x28] sm:$0xff]
          %v963 = vld [vmem:[%s369 + $0x30] sm:$0xff]
          %v964 = vld [vmem:[%s369 + $0x38] sm:$0xff]
          %v965 = vld [vmem:[%s369 + $0x40] sm:$0xff]
          %v966 = vld [vmem:[%s369 + $0x48] sm:$0xff]
          %v967 = vld [vmem:[%s369 + $0x50] sm:$0xff]
          %v968 = vld [vmem:[%s369 + $0x58] sm:$0xff]
          %v969 = vld [vmem:[%s369 + $0x60] sm:$0xff]
          %v970 = vld [vmem:[%s369 + $0x68] sm:$0xff]
          %v971 = vld [vmem:[%s369 + $0x70] sm:$0xff]
          %v972 = vld [vmem:[%s369 + $0x78] sm:$0xff]
          %v973 = vld [vmem:[%s4] sm:$0x1]
          %v975 = vlaneseq
          %v976 = vshrl.u32 %v975, 7
          %v977 = vsub.s32 0, %v976
          %v978 = vrot.slane %v973, %v977
          %v980 = vadd.f32 %v957, %v978
          %v981 = vadd.f32 %v958, %v978
          %v982 = vadd.f32 %v959, %v978
          %v983 = vadd.f32 %v960, %v978
          %v984 = vadd.f32 %v961, %v978
          %v985 = vadd.f32 %v962, %v978
          %v986 = vadd.f32 %v963, %v978
          %v987 = vadd.f32 %v964, %v978
          %v988 = vadd.f32 %v965, %v978
          %v989 = vadd.f32 %v966, %v978
          %v990 = vadd.f32 %v967, %v978
          %v991 = vadd.f32 %v968, %v978
          %v992 = vadd.f32 %v969, %v978
          %v993 = vadd.f32 %v970, %v978
          %v994 = vadd.f32 %v971, %v978
          %v995 = vadd.f32 %v972, %v978
          %996 = vst [vmem:[%s369] sm:$0xff] %v980
          %997 = vst [vmem:[%s369 + $0x8] sm:$0xff] %v981
          %998 = vst [vmem:[%s369 + $0x10] sm:$0xff] %v982
          %999 = vst [vmem:[%s369 + $0x18] sm:$0xff] %v983
          %1000 = vst [vmem:[%s369 + $0x20] sm:$0xff] %v984
          %1001 = vst [vmem:[%s369 + $0x28] sm:$0xff] %v985
          %1002 = vst [vmem:[%s369 + $0x30] sm:$0xff] %v986
          %1003 = vst [vmem:[%s369 + $0x38] sm:$0xff] %v987
          %1004 = vst [vmem:[%s369 + $0x40] sm:$0xff] %v988
          %1005 = vst [vmem:[%s369 + $0x48] sm:$0xff] %v989
          %1006 = vst [vmem:[%s369 + $0x50] sm:$0xff] %v990
          %1007 = vst [vmem:[%s369 + $0x58] sm:$0xff] %v991
          %1008 = vst [vmem:[%s369 + $0x60] sm:$0xff] %v992
          %1009 = vst [vmem:[%s369 + $0x68] sm:$0xff] %v993
          %1010 = vst [vmem:[%s369 + $0x70] sm:$0xff] %v994
          %1011 = vst [vmem:[%s369 + $0x78] sm:$0xff] %v995
        $region64: #{_ffn_swiglu_call.1} parent=39 // pred_fallthru
          _
        %s1012 = sand.u32 %s173, 1
        %s1013 = scalar_lea.sflag [#allocation4], %s1012
        %s1014 = sand.u32 %s173, 1
        %s1015 = smul.addr %s1014, 128
        %s1016 = scalar_lea.vmem [#allocation10], %s1015
        // Predicated region
        $region65: #{_ffn_swiglu_call.1} parent=39 // pred_check
          %p1017 = pneg %p183
        $region66: #{_ffn_swiglu_call.1} parent=39 // pred_check_branch
          %1019 = sbr.rel (%p1017) target = $region68
        $region67: #{_ffn_swiglu_call.1} parent=39 // pred_region
          %s1020 = smul.u32 16, %s32
          %s1022 = ssub.s32 2048, 2048
          %1023 = vsyncadd %s1013, %s1022
          %s1024 = smul.addr %s1020, 128
          %s1025 = scalar_lea.hbm %s5, %s1024
          %s1026 = sshll.u32 %s1016, 4
          %s1027 = int_to_ptr.vmem [resolvable:$true] %s1026
          %1032 = dma.vmem_to_hbm [thread:$0]  %s1027, 2048, %s1025, %s1013, 128, 128, 8
        $region68: #{_ffn_swiglu_call.1} parent=39 // pred_fallthru
          _
      $region40: #{_ffn_swiglu_call.1} parent=5 // pred_fallthru
        _
      %p1033 = scmp.le.s32.totalorder 2, %s23
      // Predicated region
      $region69: #{_ffn_swiglu_call.1} parent=5 // pred_check
        %p1034 = pneg %p1033
      $region70: #{_ffn_swiglu_call.1} parent=5 // pred_check_branch
        %1036 = sbr.rel (%p1034) target = $region72
      $region71: #{_ffn_swiglu_call.1} parent=5 // pred_region
        %s1037 = ssub.s32 %s23, 2
        // Predicated region
        $region73: #{_ffn_swiglu_call.1} parent=71 // pred_check
          %p1038 = pneg %p189
        $region74: #{_ffn_swiglu_call.1} parent=71 // pred_check_branch
          %1040 = sbr.rel (%p1038) target = $region76
        $region75: #{_ffn_swiglu_call.1} parent=71 // pred_region
          %s1041 = sand.u32 %s174, 1
          %s1042 = scalar_lea.sflag [#allocation4], %s1041
          %s1043 = sand.u32 %s174, 1
          %s1044 = smul.addr %s1043, 128
          %s1045 = scalar_lea.vmem [#allocation10], %s1044
          %1046 = dma.done %s1042, 2048
        $region76: #{_ffn_swiglu_call.1} parent=71 // pred_fallthru
          _
      $region72: #{_ffn_swiglu_call.1} parent=5 // pred_fallthru
        _
    $region6: #{_ffn_swiglu_call.1} parent=1 // loop_footer
      %s27 = sadd.s32 1, %s23
    $region7: #{_ffn_swiglu_call.1} parent=1 // loop_footer_branch
      %22 = sbr.rel target = $region3
    $region8: #{_ffn_swiglu_call.1} parent=1 // loop_exit
      _
    %1047 = vsyncpa [#allocation3], 1
    %s1048 = scalar_lea.sflag [#allocation3], 1
    %1049 = vsyncpa %s1048, 1
    %1050 = vsyncpa [#allocation6], 1
    %s1051 = scalar_lea.sflag [#allocation6], 1
    %1052 = vsyncpa %s1051, 1
    %1053 = vsyncpa [#allocation9], 1
    %s1054 = scalar_lea.sflag [#allocation9], 1
    %1055 = vsyncpa %s1054, 1
    %1056 = vsyncpa [#allocation4], 1
    %s1057 = scalar_lea.sflag [#allocation4], 1
    %1058 = vsyncpa %s1057, 1

</llo_original>
